<compile_context>
chip_gen: v5e
topology: v5e:2x2
jax: 0.10.0
libtpu: 0.0.40
codegen_flags: <defaults>
</compile_context>

<pallas_src>
import functools
import math

import jax
import jax.numpy as jnp
from jax.experimental import pallas as pl
from jax.experimental.pallas import tpu as pltpu

PDIST_EPS = 1e-6


def _round_up(a, b):
    return (a + b - 1) // b * b


def _graph_layer_kernel(rows_ref, b_i_ref, simT_ref, colstats_ref, xw_ref, out_ref, *,
                        has_col_pad, matmul_dtype):
    # rows_ref  : (TM, Fp)  = -2 * sim rows of this tile (streamed)
    # b_i_ref   : (TM, 1)   = |s_i|^2 + 2*eps*sum(s_i) + F*eps^2 (streamed)
    # simT_ref  : (Fp, Np)  = sim^T (resident)
    # colstats  : (8, Np)   row 0 = b_j, row 1 = additive row-max mask (resident)
    # xw_ref    : (Np, Cp)  = x @ W (resident)

    # Single MXU matmul of the distance phase: -2 * (sim_i . sim_j), f32 accumulation.
    gram2 = jnp.dot(rows_ref[...], simT_ref[...],
                    preferred_element_type=jnp.float32)            # (TM, Np)

    b_j = colstats_ref[0:1, :]                                     # (1, Np)
    # Exact expansion of ||s_i - s_j + eps||^2; cancellation can push it slightly negative.
    d2 = jnp.maximum(gram2 + b_i_ref[...] + b_j, 0.0)              # (TM, Np)

    if has_col_pad:
        # Keep padded columns (j >= N) out of the row max via a precomputed additive mask.
        d2_for_max = d2 + colstats_ref[1:2, :]
    else:
        d2_for_max = d2
    d2_max = jnp.max(d2_for_max, axis=1, keepdims=True)            # (TM, 1)

    # sqrt is monotone, so max over d2 == max over dist; one rsqrt per row on the EUP.
    # (Tiny floor guards degenerate / padded rows against inf; the PyTorch reference would
    #  produce NaN/Inf there — intentional divergence.)
    inv_max = jax.lax.rsqrt(jnp.maximum(d2_max, 1e-30))
    g = 1.0 - jnp.sqrt(d2) * inv_max                               # affinity, padded cols
    #                                                               # left unmasked: the
    #                                                               # matching xw rows are 0.

    out = jnp.dot(g.astype(matmul_dtype), xw_ref[...],
                  preferred_element_type=jnp.float32)              # (TM, Cp)
    out_ref[...] = out.astype(out_ref.dtype)


def graph_layer(x, sim_feat, weight, *, block_rows=128, matmul_dtype=jnp.bfloat16):
    """out = (affinity(sim_feat) @ x) @ weight, matching Graph_Layer.forward."""
    n, _ = x.shape
    f = sim_feat.shape[1]
    c_out = weight.shape[1]
    f32 = jnp.float32

    # Row tile: multiple of 8, capped at the node count, and capped again so the parallel
    # grid has >= 2 row tiles whenever N allows (two TensorCores on v7x / megacore).
    tm = min(_round_up(block_rows, 8), _round_up(n, 8))
    if n > 8:
        tm = min(tm, _round_up(pl.cdiv(n, 2), 8))

    # Decoupled padding: rows only to a multiple of TM, columns / resident dims to 128.
    n_rows = _round_up(n, tm)
    n_cols = _round_up(n, 128)
    f_pad = _round_up(f, 128)
    c_pad = _round_up(c_out, 128)

    sim_f32 = sim_feat.astype(f32)

    # Streamed gram LHS, pre-scaled by -2 (exact: power-of-two scale), zero-padded.
    rows = jnp.zeros((n_rows, f_pad), f32).at[:n, :f].set(-2.0 * sim_f32)

    # Resident gram RHS: sim^T, lane-dense along the column (j) dimension.
    simT = jnp.zeros((f_pad, n_cols), f32).at[:f, :n].set(sim_f32.T)

    # Hoisted distance biases (computed once here instead of once per row tile).
    sq = jnp.sum(sim_f32 * sim_f32, axis=1)                        # (N,)
    sm = jnp.sum(sim_f32, axis=1)                                  # (N,)
    b_i = sq + (2.0 * PDIST_EPS) * sm + f * (PDIST_EPS * PDIST_EPS)
    b_i_p = jnp.zeros((n_rows, 1), f32).at[:n, 0].set(b_i)

    b_j = sq - (2.0 * PDIST_EPS) * sm
    colstats = jnp.zeros((8, n_cols), f32).at[0, :n].set(b_j)
    has_col_pad = n_cols != n
    if has_col_pad:
        colstats = colstats.at[1, n:].set(-1e30)                   # row-max mask for pads

    # Hoisted, reassociated right-hand matmul: out = G @ (x @ W).  Padded rows are zero,
    # which is what lets the kernel skip masking padded G columns.
    xw = jnp.dot(x.astype(f32), weight.astype(f32), preferred_element_type=f32)
    xw_p = jnp.zeros((n_cols, c_pad), f32).at[:n, :c_out].set(xw).astype(matmul_dtype)

    # Explicit scoped-VMEM budget: residents (x2 to cover pipeline buffering of the
    # constant-index operands), double-buffered streams, and a few (TM, Np) f32 temps.
    mm_bytes = jnp.dtype(matmul_dtype).itemsize
    resident = f_pad * n_cols * 4 + 8 * n_cols * 4 + n_cols * c_pad * mm_bytes
    streamed = 2 * (tm * f_pad * 4 + tm * 128 * 4 + tm * c_pad * 4)
    temps = 4 * tm * n_cols * 4
    vmem_limit = int(min(max(2 * resident + streamed + temps + (4 << 20), 32 << 20),
                         64 << 20))

    kernel = functools.partial(_graph_layer_kernel,
                               has_col_pad=has_col_pad, matmul_dtype=matmul_dtype)

    out_p = pl.pallas_call(
        kernel,
        out_shape=jax.ShapeDtypeStruct((n_rows, c_pad), f32),
        grid=(n_rows // tm,),
        in_specs=[
            pl.BlockSpec((tm, f_pad), lambda i: (i, 0)),        # -2 * sim rows (streamed)
            pl.BlockSpec((tm, 1), lambda i: (i, 0)),            # b_i rows (streamed)
            pl.BlockSpec((f_pad, n_cols), lambda i: (0, 0)),    # sim^T (resident)
            pl.BlockSpec((8, n_cols), lambda i: (0, 0)),        # [b_j; mask] (resident)
            pl.BlockSpec((n_cols, c_pad), lambda i: (0, 0)),    # x @ W (resident)
        ],
        out_specs=pl.BlockSpec((tm, c_pad), lambda i: (i, 0)),
        compiler_params=pltpu.CompilerParams(
            dimension_semantics=("parallel",),                  # row tiles split across TCs
            vmem_limit_bytes=vmem_limit),
    )(rows, b_i_p, simT, colstats, xw_p)

    return out_p[:n, :c_out].astype(x.dtype)


def graph_layer_ref(x, sim_feat, weight):
    """Pure-JAX reference mirroring the PyTorch module exactly (f32, naive broadcast)."""
    diff = sim_feat[:, None, :] - sim_feat[None, :, :] + PDIST_EPS
    dist = jnp.sqrt(jnp.sum(diff * diff, axis=-1))
    g = 1.0 - dist / jnp.max(dist, axis=1, keepdims=True)
    return (g @ x) @ weight


def make_weight(key, in_size, n_out):
    """kaiming_uniform_(a=sqrt(5)) on an (in_size, n_out) tensor; PyTorch fan_in = size(1)."""
    fan_in = n_out
    gain = math.sqrt(2.0 / (1.0 + 5.0))          # a = sqrt(5)
    bound = gain * math.sqrt(3.0 / fan_in)
    return jax.random.uniform(
        key, (in_size, n_out), minval=-bound, maxval=bound, dtype=jnp.float32)


if __name__ == "__main__":
    key = jax.random.PRNGKey(0)

    # --- small demo shapes consistent with the module ----------------------------------
    N, F_SIM, IN_SIZE, N_OUT = 8, 16, 32, 32
    kx, ks, kw, k2 = jax.random.split(key, 4)
    x = jax.random.normal(kx, (N, IN_SIZE), dtype=jnp.float32)
    sim_feat = jax.random.normal(ks, (N, F_SIM), dtype=jnp.float32)
    weight = make_weight(kw, IN_SIZE, N_OUT)

    ref = graph_layer_ref(x, sim_feat, weight)

    # f32 matmul path: tight check against the exact PyTorch-style reference
    # (tolerance covers the Gram-form cancellation on the diagonal).
    out_f32 = jax.block_until_ready(
        graph_layer(x, sim_feat, weight, matmul_dtype=jnp.float32))
    assert out_f32.shape == (N, N_OUT)
    assert jnp.allclose(out_f32, ref, rtol=2e-3, atol=2e-3), "f32 path mismatch vs reference"

    # Default production path (bf16 G @ xw on the MXU, f32 accumulation): looser tolerance.
    out_bf16 = jax.block_until_ready(graph_layer(x, sim_feat, weight))
    assert out_bf16.shape == (N, N_OUT)
    assert jnp.allclose(out_bf16, ref, rtol=5e-2, atol=5e-2), "bf16 path mismatch vs reference"

    # --- second shape exercising multi-step row tiling, column masking and padding -----
    N2, F2, C2_IN, C2_OUT = 90, 24, 48, 40
    kx2, ks2, kw2 = jax.random.split(k2, 3)
    x2 = jax.random.normal(kx2, (N2, C2_IN), dtype=jnp.float32)
    sim2 = jax.random.normal(ks2, (N2, F2), dtype=jnp.float32)
    w2 = make_weight(kw2, C2_IN, C2_OUT)

    ref2 = graph_layer_ref(x2, sim2, w2)
    out2 = jax.block_until_ready(
        graph_layer(x2, sim2, w2, block_rows=32, matmul_dtype=jnp.float32))
    assert out2.shape == (N2, C2_OUT)
    assert jnp.allclose(out2, ref2, rtol=2e-3, atol=2e-3), "tiled path mismatch vs reference"

    print("KERNEL_OK")
</pallas_src>

<mosaic_0001>
module attributes {stable_mosaic.version = 11 : i64} {
  func.func @_graph_layer_kernel(%arg0: i32, %arg1: memref<8x128xf32, #tpu.memory_space<vmem>>, %arg2: memref<8x1xf32, #tpu.memory_space<vmem>>, %arg3: memref<128x128xf32, #tpu.memory_space<vmem>>, %arg4: memref<8x128xf32, #tpu.memory_space<vmem>>, %arg5: memref<128x128xf32, #tpu.memory_space<vmem>>, %arg6: memref<8x128xf32, #tpu.memory_space<vmem>>) attributes {dimension_semantics = [#tpu.dimension_semantics<parallel>], iteration_bounds = array<i64: 1>, scalar_prefetch = 0 : i64, scratch_operands = 0 : i64, tpu.core_type = #tpu.core_type<tc>, window_params = [{transform_indices = @transform_0, window_bounds = array<i64: 8, 128>}, {transform_indices = @transform_1, window_bounds = array<i64: 8, 1>}, {pipeline_mode = #tpu.pipeline_mode<synchronous>, transform_indices = @transform_2, window_bounds = array<i64: 128, 128>}, {pipeline_mode = #tpu.pipeline_mode<synchronous>, transform_indices = @transform_3, window_bounds = array<i64: 8, 128>}, {pipeline_mode = #tpu.pipeline_mode<synchronous>, transform_indices = @transform_4, window_bounds = array<i64: 128, 128>}, {transform_indices = @transform_5, window_bounds = array<i64: 8, 128>}]} {
    %c0 = arith.constant 0 : index
    %c0_0 = arith.constant 0 : index
    %0 = vector.load %arg1[%c0, %c0_0] : memref<8x128xf32, #tpu.memory_space<vmem>>, vector<8x128xf32>
    %c0_1 = arith.constant 0 : index
    %c0_2 = arith.constant 0 : index
    %1 = vector.load %arg3[%c0_1, %c0_2] : memref<128x128xf32, #tpu.memory_space<vmem>>, vector<128x128xf32>
    %cst = arith.constant dense<0.000000e+00> : vector<8x128xf32>
    %2 = tpu.matmul %0, %1, %cst {dimension_numbers = #tpu.dot_dimension_numbers<[1], [0], [0], [1], [0, 0, 1, 1], [], []>} : vector<8x128xf32>, vector<128x128xf32>, vector<8x128xf32> -> vector<8x128xf32>
    %c0_3 = arith.constant 0 : index
    %c0_4 = arith.constant 0 : index
    %3 = vector.load %arg4[%c0_3, %c0_4] : memref<8x128xf32, #tpu.memory_space<vmem>>, vector<1x128xf32>
    %c0_5 = arith.constant 0 : index
    %c0_6 = arith.constant 0 : index
    %4 = vector.load %arg2[%c0_5, %c0_6] : memref<8x1xf32, #tpu.memory_space<vmem>>, vector<8x1xf32>
    %5 = vector.broadcast %4 : vector<8x1xf32> to vector<8x128xf32>
    %6 = arith.addf %2, %5 : vector<8x128xf32>
    %7 = vector.broadcast %3 : vector<1x128xf32> to vector<8x128xf32>
    %8 = arith.addf %6, %7 : vector<8x128xf32>
    %cst_7 = arith.constant 0.000000e+00 : f32
    %9 = vector.broadcast %cst_7 : f32 to vector<8x128xf32>
    %10 = arith.maximumf %8, %9 : vector<8x128xf32>
    %c1 = arith.constant 1 : index
    %c0_8 = arith.constant 0 : index
    %11 = vector.load %arg4[%c1, %c0_8] : memref<8x128xf32, #tpu.memory_space<vmem>>, vector<1x128xf32>
    %12 = vector.broadcast %11 : vector<1x128xf32> to vector<8x128xf32>
    %13 = arith.addf %10, %12 : vector<8x128xf32>
    %cst_9 = arith.constant dense<0xFF800000> : vector<8xf32>
    %14 = vector.multi_reduction <maximumf>, %13, %cst_9 [1] : vector<8x128xf32> to vector<8xf32>
    %15 = vector.shape_cast %14 : vector<8xf32> to vector<8x1xf32>
    %cst_10 = arith.constant 1.000000e-30 : f32
    %16 = vector.broadcast %cst_10 : f32 to vector<8x1xf32>
    %17 = arith.maximumf %15, %16 : vector<8x1xf32>
    %18 = math.rsqrt %17 : vector<8x1xf32>
    %19 = math.sqrt %10 : vector<8x128xf32>
    %20 = vector.broadcast %18 : vector<8x1xf32> to vector<8x128xf32>
    %21 = arith.mulf %19, %20 : vector<8x128xf32>
    %cst_11 = arith.constant 1.000000e+00 : f32
    %22 = vector.broadcast %cst_11 : f32 to vector<8x128xf32>
    %23 = arith.subf %22, %21 : vector<8x128xf32>
    %c0_12 = arith.constant 0 : index
    %c0_13 = arith.constant 0 : index
    %24 = vector.load %arg5[%c0_12, %c0_13] : memref<128x128xf32, #tpu.memory_space<vmem>>, vector<128x128xf32>
    %cst_14 = arith.constant dense<0.000000e+00> : vector<8x128xf32>
    %25 = tpu.matmul %23, %24, %cst_14 {dimension_numbers = #tpu.dot_dimension_numbers<[1], [0], [0], [1], [0, 0, 1, 1], [], []>} : vector<8x128xf32>, vector<128x128xf32>, vector<8x128xf32> -> vector<8x128xf32>
    %c0_15 = arith.constant 0 : index
    %c0_16 = arith.constant 0 : index
    %26 = vector.load %arg6[%c0_15, %c0_16] : memref<8x128xf32, #tpu.memory_space<vmem>>, vector<8x128xf32>
    tpu.vector_store %arg6[%c0_15, %c0_16], %25 {strides = array<i32>} : memref<8x128xf32, #tpu.memory_space<vmem>>, vector<8x128xf32>,
    return
  }
  func.func @transform_0(%arg0: i32) -> (i32, i32) {
    %c0_i32 = arith.constant 0 : i32
    %c0_i32_0 = arith.constant 0 : i32
    return %arg0, %c0_i32 : i32, i32
  }
  func.func @transform_1(%arg0: i32) -> (i32, i32) {
    %c0_i32 = arith.constant 0 : i32
    %c0_i32_0 = arith.constant 0 : i32
    return %arg0, %c0_i32 : i32, i32
  }
  func.func @transform_2(%arg0: i32) -> (i32, i32) {
    %c0_i32 = arith.constant 0 : i32
    %c0_i32_0 = arith.constant 0 : i32
    %c0_i32_1 = arith.constant 0 : i32
    return %c0_i32, %c0_i32_0 : i32, i32
  }
  func.func @transform_3(%arg0: i32) -> (i32, i32) {
    %c0_i32 = arith.constant 0 : i32
    %c0_i32_0 = arith.constant 0 : i32
    %c0_i32_1 = arith.constant 0 : i32
    return %c0_i32, %c0_i32_0 : i32, i32
  }
  func.func @transform_4(%arg0: i32) -> (i32, i32) {
    %c0_i32 = arith.constant 0 : i32
    %c0_i32_0 = arith.constant 0 : i32
    %c0_i32_1 = arith.constant 0 : i32
    return %c0_i32, %c0_i32_0 : i32, i32
  }
  func.func @transform_5(%arg0: i32) -> (i32, i32) {
    %c0_i32 = arith.constant 0 : i32
    %c0_i32_0 = arith.constant 0 : i32
    return %arg0, %c0_i32 : i32, i32
  }
}

</mosaic_0001>

<llo_original>
// kernel: tpu_custom_call.1
$region0: #{tpu_custom_call.1}
  #allocation0 [shape = 'u32[]', space=smem, size = 0x4, offset = 0x4, fixed_abs, tag = 'smem constant byte address 0x4 - core index']
  #allocation1 [shape = 'u32[72,128]{1,0:T(1,128)}', space=vmem, size = 0x9000, scoped, tag = 'internal scratch']
  %s0 = inlined_call_operand.vmem [shape: f32[8,128], index: 0, kind: input, shape index: {}]
  %s1 = inlined_call_operand.vmem [shape: f32[8,1], index: 1, kind: input, shape index: {}]
  %s2 = inlined_call_operand.hbm [shape: f32[128,128], index: 2, kind: input, shape index: {}]
  %s3 = inlined_call_operand.hbm [shape: f32[8,128], index: 3, kind: input, shape index: {}]
  %s4 = inlined_call_operand.hbm [shape: f32[128,128], index: 4, kind: input, shape index: {}]
  %s5 = inlined_call_operand.hbm [shape: f32[8,128], index: 5, kind: output, shape index: {}]
  %s6 = sld [smem:[#allocation0]]
  $region42: #{tpu_custom_call.1} parent=0
    _
  %s8 = ssub.s32 1, %s6
  %s9 = scalar_select 0, %s8, %s6
  $region1: #{tpu_custom_call.1} parent=0
    #allocation2 [shape = 'u8[65536]{0}', space=vmem, size = 0x10000, scoped, tag = 'input window, operand 2, single buffered']
    #allocation3 [shape = 's32[1]{0}', space=sflag, size = 0x4, scoped, tag = 'scoped memory for tpu_custom_call.1']
    #allocation4 [shape = 's32[1]{0}', space=sflag, size = 0x4, scoped, tag = 'scoped memory for tpu_custom_call.1']
    #allocation5 [shape = 'u8[4096]{0}', space=vmem, size = 0x1000, scoped, tag = 'input window, operand 3, single buffered']
    #allocation6 [shape = 's32[1]{0}', space=sflag, size = 0x4, scoped, tag = 'scoped memory for tpu_custom_call.1']
    #allocation7 [shape = 'u8[65536]{0}', space=vmem, size = 0x10000, scoped, tag = 'input window, operand 4, single buffered']
    #allocation8 [shape = 'u8[4096]{0}', space=vmem, size = 0x1000, scoped, tag = 'output window, operand 0, single buffered']
    %10 = vsyncpa [#allocation3], 0
    %11 = vsyncpa [#allocation6], 0
    %12 = vsyncpa [#allocation4], 0
    // Predicated region
    $region2: #{tpu_custom_call.1} parent=1 // pred_check
      _
    $region3: #{tpu_custom_call.1} parent=1 // pred_check_branch
      %14 = sbr.rel (0) target = $region5
    $region4: #{tpu_custom_call.1} parent=1 // pred_region
      _
    $region5: #{tpu_custom_call.1} parent=1 // pred_fallthru
      _
    // Predicated region
    $region6: #{tpu_custom_call.1} parent=1 // pred_check
      _
    $region7: #{tpu_custom_call.1} parent=1 // pred_check_branch
      %16 = sbr.rel (0) target = $region9
    $region8: #{tpu_custom_call.1} parent=1 // pred_region
      _
    $region9: #{tpu_custom_call.1} parent=1 // pred_fallthru
      _
    // Predicated region
    $region10: #{tpu_custom_call.1} parent=1 // pred_check
      _
    $region11: #{tpu_custom_call.1} parent=1 // pred_check_branch
      %18 = sbr.rel (0) target = $region13
    $region12: #{tpu_custom_call.1} parent=1 // pred_region
      %20 = vsyncadd [#allocation3], 0
      %s21 = sshll.u32 %s2, 4
      %s22 = int_to_ptr.hbm [resolvable:$true] %s21
      %s23 = sshll.u32 [#allocation2], 4
      %s24 = int_to_ptr.vmem [resolvable:$true] %s23
      %29 = dma.hbm_to_vmem [thread:$0]  %s22, 2048, %s24, [#allocation3], 128, 128, 8
    $region13: #{tpu_custom_call.1} parent=1 // pred_fallthru
      _
    // Predicated region
    $region14: #{tpu_custom_call.1} parent=1 // pred_check
      _
    $region15: #{tpu_custom_call.1} parent=1 // pred_check_branch
      %31 = sbr.rel (0) target = $region17
    $region16: #{tpu_custom_call.1} parent=1 // pred_region
      %33 = vsyncadd [#allocation6], 0
      %s35 = sshll.u32 %s3, 4
      %s36 = int_to_ptr.hbm [resolvable:$true] %s35
      %s37 = sshll.u32 [#allocation5], 4
      %s38 = int_to_ptr.vmem [resolvable:$true] %s37
      %40 = dma.hbm_to_vmem [thread:$0]  %s36, 128, %s38, [#allocation6]
    $region17: #{tpu_custom_call.1} parent=1 // pred_fallthru
      _
    // Predicated region
    $region18: #{tpu_custom_call.1} parent=1 // pred_check
      _
    $region19: #{tpu_custom_call.1} parent=1 // pred_check_branch
      %42 = sbr.rel (0) target = $region21
    $region20: #{tpu_custom_call.1} parent=1 // pred_region
      %44 = vsyncadd [#allocation6], 0
      %s45 = sshll.u32 %s4, 4
      %s46 = int_to_ptr.hbm [resolvable:$true] %s45
      %s47 = sshll.u32 [#allocation7], 4
      %s48 = int_to_ptr.vmem [resolvable:$true] %s47
      %53 = dma.hbm_to_vmem [thread:$0]  %s46, 2048, %s48, [#allocation6], 128, 128, 8
    $region21: #{tpu_custom_call.1} parent=1 // pred_fallthru
      _
    // Predicated region
    $region22: #{tpu_custom_call.1} parent=1 // pred_check
      _
    $region23: #{tpu_custom_call.1} parent=1 // pred_check_branch
      %55 = sbr.rel (0) target = $region25
    $region24: #{tpu_custom_call.1} parent=1 // pred_region
      %57 = dma.done [#allocation3], 2048
    $region25: #{tpu_custom_call.1} parent=1 // pred_fallthru
      _
    // Predicated region
    $region26: #{tpu_custom_call.1} parent=1 // pred_check
      _
    $region27: #{tpu_custom_call.1} parent=1 // pred_check_branch
      %59 = sbr.rel (0) target = $region29
    $region28: #{tpu_custom_call.1} parent=1 // pred_region
      %61 = dma.done [#allocation6], 128
    $region29: #{tpu_custom_call.1} parent=1 // pred_fallthru
      _
    // Predicated region
    $region30: #{tpu_custom_call.1} parent=1 // pred_check
      _
    $region31: #{tpu_custom_call.1} parent=1 // pred_check_branch
      %63 = sbr.rel (0) target = $region33
    $region32: #{tpu_custom_call.1} parent=1 // pred_region
      %65 = dma.done [#allocation6], 2048
    $region33: #{tpu_custom_call.1} parent=1 // pred_fallthru
      _
    %v66 = vld [vmem:[%s0] sm:$0xff]
    %v67 = vld [vmem:[#allocation2] sm:$0xff]
    %v68 = vld [vmem:[#allocation2 + $0x8] sm:$0xff]
    %v69 = vld [vmem:[#allocation2 + $0x10] sm:$0xff]
    %v70 = vld [vmem:[#allocation2 + $0x18] sm:$0xff]
    %v71 = vld [vmem:[#allocation2 + $0x20] sm:$0xff]
    %v72 = vld [vmem:[#allocation2 + $0x28] sm:$0xff]
    %v73 = vld [vmem:[#allocation2 + $0x30] sm:$0xff]
    %v74 = vld [vmem:[#allocation2 + $0x38] sm:$0xff]
    %v75 = vld [vmem:[#allocation2 + $0x40] sm:$0xff]
    %v76 = vld [vmem:[#allocation2 + $0x48] sm:$0xff]
    %v77 = vld [vmem:[#allocation2 + $0x50] sm:$0xff]
    %v78 = vld [vmem:[#allocation2 + $0x58] sm:$0xff]
    %v79 = vld [vmem:[#allocation2 + $0x60] sm:$0xff]
    %v80 = vld [vmem:[#allocation2 + $0x68] sm:$0xff]
    %v81 = vld [vmem:[#allocation2 + $0x70] sm:$0xff]
    %v82 = vld [vmem:[#allocation2 + $0x78] sm:$0xff]
    %v83 = vld [vmem:[#allocation5] sm:$0x1]
    %v84 = vld [vmem:[%s1] sm:$0xff]
    %86 = vset.pattern.permute.xlu0 0
    %87 = vperm.xlu0 %86, %v84
    %v88 = vpop.permute.xlu0 %87
    %90 = vmatpush.msra.mxu0 %v82
    %91 = vmatpush.msra.mxu0 %v81
    %92 = vmatpush.msra.mxu0 %v80
    %93 = vmatpush.msra.mxu0 %v79
    %94 = vmatpush.msra.mxu0 %v78
    %95 = vmatpush.msra.mxu0 %v77
    %96 = vmatpush.msra.mxu0 %v76
    %97 = vmatpush.msra.mxu0 %v75
    %98 = vmatpush.msra.mxu0 %v74
    %99 = vmatpush.msra.mxu0 %v73
    %100 = vmatpush.msra.mxu0 %v72
    %101 = vmatpush.msra.mxu0 %v71
    %102 = vmatpush.msra.mxu0 %v70
    %103 = vmatpush.msra.mxu0 %v69
    %104 = vmatpush.msra.mxu0 %v68
    %105 = vmatpush.msra.mxu0 %v67
    %106 = vmatmul.f32.gmra.mxu0 %v66
    %v107 = vpop.f32.mrf.mxu0
    %v108 = vadd.f32 %v88, %v107
    %109 = vdwg.mxu0
    %v110 = vperm.slane %v83, 0
    %v111 = vadd.f32 %v108, %v110
    %v112 = vmax.f32 %v111, 0.0
    %v113 = vld [vmem:[#allocation5 + $0x1] sm:$0x1]
    %v114 = vperm.slane %v113, 0
    %v115 = vadd.f32 %v112, %v114
    %116 = vmax.xlane.f32.xlu0 %v115
    %v117 = vpop.xlane.xlu0 %116
    %v118 = vmax.f32 %v117, 1e-30
    %v119 = vrsqrt.pop %v118
    %v120 = vmul.f32 %v119, %v118
    %v121 = vmul.f32 %v120, %v119
    %v122 = vmul.f32 0.5, %v121
    %v123 = vsub.f32 1.5, %v122
    %v124 = vmul.f32 %v119, %v123
    %vm125 = vweird.f32 %v118
    %vm126 = vweird.f32 %v119
    %vm127 = vmor %vm125, %vm126
    %v128 = vsel %vm127, %v119, %v124
    %v129 = vrsqrt.pop %v112
    %v130 = vmul.f32 %v129, %v112
    %v131 = vmul.f32 %v130, %v129
    %v132 = vmul.f32 0.5, %v131
    %v133 = vsub.f32 1.5, %v132
    %v134 = vmul.f32 %v129, %v133
    %v135 = vmul.f32 %v112, %v134
    %vm136 = vcmp.eq.f32.partialorder %v112, inf
    %v137 = vsel %vm136, %v112, %v135
    %vm138 = vcmp.eq.f32.partialorder %v112, 0.0
    %v139 = vand.u32 %v112, 2147483648
    %v140 = vsel %vm138, %v139, %v137
    %v141 = vmul.f32 %v140, %v128
    %v142 = vsub.f32 1.0, %v141
    %v143 = vld [vmem:[#allocation7] sm:$0xff]
    %v144 = vld [vmem:[#allocation7 + $0x8] sm:$0xff]
    %v145 = vld [vmem:[#allocation7 + $0x10] sm:$0xff]
    %v146 = vld [vmem:[#allocation7 + $0x18] sm:$0xff]
    %v147 = vld [vmem:[#allocation7 + $0x20] sm:$0xff]
    %v148 = vld [vmem:[#allocation7 + $0x28] sm:$0xff]
    %v149 = vld [vmem:[#allocation7 + $0x30] sm:$0xff]
    %v150 = vld [vmem:[#allocation7 + $0x38] sm:$0xff]
    %v151 = vld [vmem:[#allocation7 + $0x40] sm:$0xff]
    %v152 = vld [vmem:[#allocation7 + $0x48] sm:$0xff]
    %v153 = vld [vmem:[#allocation7 + $0x50] sm:$0xff]
    %v154 = vld [vmem:[#allocation7 + $0x58] sm:$0xff]
    %v155 = vld [vmem:[#allocation7 + $0x60] sm:$0xff]
    %v156 = vld [vmem:[#allocation7 + $0x68] sm:$0xff]
    %v157 = vld [vmem:[#allocation7 + $0x70] sm:$0xff]
    %v158 = vld [vmem:[#allocation7 + $0x78] sm:$0xff]
    %159 = vmatpush.msra.mxu0 %v158
    %160 = vmatpush.msra.mxu0 %v157
    %161 = vmatpush.msra.mxu0 %v156
    %162 = vmatpush.msra.mxu0 %v155
    %163 = vmatpush.msra.mxu0 %v154
    %164 = vmatpush.msra.mxu0 %v153
    %165 = vmatpush.msra.mxu0 %v152
    %166 = vmatpush.msra.mxu0 %v151
    %167 = vmatpush.msra.mxu0 %v150
    %168 = vmatpush.msra.mxu0 %v149
    %169 = vmatpush.msra.mxu0 %v148
    %170 = vmatpush.msra.mxu0 %v147
    %171 = vmatpush.msra.mxu0 %v146
    %172 = vmatpush.msra.mxu0 %v145
    %173 = vmatpush.msra.mxu0 %v144
    %174 = vmatpush.msra.mxu0 %v143
    %175 = vmatmul.f32.gmra.mxu0 %v142
    %v176 = vpop.f32.mrf.mxu0
    %v177 = vadd.f32 0.0, %v176
    %178 = vdwg.mxu0
    %179 = vst [vmem:[#allocation8] sm:$0xff] %v177
    // Predicated region
    $region34: #{tpu_custom_call.1} parent=1 // pred_check
      _
    $region35: #{tpu_custom_call.1} parent=1 // pred_check_branch
      %181 = sbr.rel (0) target = $region37
    $region36: #{tpu_custom_call.1} parent=1 // pred_region
      %183 = vsyncadd [#allocation4], 0
      %s185 = sshll.u32 [#allocation8], 4
      %s186 = int_to_ptr.vmem [resolvable:$true] %s185
      %s187 = sshll.u32 %s5, 4
      %s188 = int_to_ptr.hbm [resolvable:$true] %s187
      %190 = dma.vmem_to_hbm [thread:$0]  %s186, 128, %s188, [#allocation4]
    $region37: #{tpu_custom_call.1} parent=1 // pred_fallthru
      _
    // Predicated region
    $region38: #{tpu_custom_call.1} parent=1 // pred_check
      _
    $region39: #{tpu_custom_call.1} parent=1 // pred_check_branch
      %192 = sbr.rel (0) target = $region41
    $region40: #{tpu_custom_call.1} parent=1 // pred_region
      %194 = dma.done [#allocation4], 128
    $region41: #{tpu_custom_call.1} parent=1 // pred_fallthru
      _
    %195 = vsyncpa [#allocation3], 1
    %196 = vsyncpa [#allocation6], 1
    %197 = vsyncpa [#allocation4], 1

</llo_original>
